<compile_context>
chip_gen: v6e
topology: v6e:2x2x1
jax: 0.10.0
libtpu: 0.0.40
codegen_flags: <defaults>
</compile_context>

<pallas_src>
import jax
import jax.numpy as jnp
from jax.experimental import pallas as pl
from jax.experimental.pallas import tpu as pltpu


def crf_kernel(logits_ref, tags_ref, mask_ref, trans_ref, start_ref, end_ref,
               out_ref,
               alpha_ref, score_ref, prev_oh_ref, last_oh_ref,
               tshift_ref, exp_trans_ref):
    """One (batch_block, timestep) grid point of the CRF forward pass."""
    t = pl.program_id(1)
    num_t = pl.num_programs(1)
    TB, L = alpha_ref.shape

    emit = logits_ref[0].astype(jnp.float32)           # (TB, L) emissions at step t
    tag_t = tags_ref[0]                                # (TB, 1) int32 gold tag at t
    mask_t = mask_ref[0]                               # (TB, 1) f32 {0, 1}
    start = start_ref[...]                             # (1, L)
    end = end_ref[...]                                 # (1, L)
    trans = trans_ref[...]                             # (L, L)

    lab_iota = jax.lax.broadcasted_iota(jnp.int32, (TB, L), 1)
    cur_oh = (tag_t == lab_iota).astype(jnp.float32)   # (TB, L) one-hot of gold tag
    emit_score = jnp.sum(cur_oh * emit, axis=-1, keepdims=True)     # (TB, 1)

    @pl.when(t == 0)
    def _init():
        # Hoisted: column-max-shifted exp(transitions), reused by every later
        # timestep of this batch block (forward recursion becomes one MXU matmul).
        tshift = jnp.max(trans, axis=0, keepdims=True)              # (1, L)
        tshift_ref[...] = tshift
        exp_trans_ref[...] = jnp.exp(trans - tshift)                # (L, L), f32

        alpha_ref[...] = start + emit
        score_ref[...] = (jnp.sum(cur_oh * start, axis=-1, keepdims=True)
                          + emit_score * mask_t)
        prev_oh_ref[...] = cur_oh
        last_oh_ref[...] = cur_oh

    @pl.when(t > 0)
    def _step():
        # ---------------- numerator: gold-path score -------------------------
        # transitions[tag_{t-1}, tag_t] via one-hot @ trans (MXU) + lane reduce.
        trans_row = jnp.dot(prev_oh_ref[...], trans,
                            preferred_element_type=jnp.float32)     # (TB, L)
        trans_score = jnp.sum(trans_row * cur_oh, axis=-1, keepdims=True)
        score_ref[...] = score_ref[...] + (trans_score + emit_score) * mask_t

        prev_oh_ref[...] = cur_oh
        # Track the tag at the last valid (masked==1) position (prefix masks).
        last_oh_ref[...] = cur_oh * mask_t + last_oh_ref[...] * (1.0 - mask_t)

        # ---------------- denominator: forward algorithm step ----------------
        # logsumexp over the "from" axis as exp(alpha - m) @ exp(trans - colmax):
        # O(TB*L) transcendentals + one MXU matmul, no (TB,L,L) intermediate.
        alpha = alpha_ref[...]                                      # (TB, L)
        m = jnp.max(alpha, axis=-1, keepdims=True)                  # (TB, 1)
        ea = jnp.exp(alpha - m)                                     # (TB, L)
        s = jnp.dot(ea, exp_trans_ref[...],
                    preferred_element_type=jnp.float32)             # (TB, L)
        new_alpha = emit + m + tshift_ref[...] + jnp.log(s)
        alpha_ref[...] = new_alpha * mask_t + alpha * (1.0 - mask_t)

    @pl.when(t == num_t - 1)
    def _finalize():
        stops = alpha_ref[...] + end                                # (TB, L)
        ms = jnp.max(stops, axis=-1, keepdims=True)
        log_z = jnp.log(jnp.sum(jnp.exp(stops - ms), axis=-1, keepdims=True)) + ms
        score = score_ref[...] + jnp.sum(last_oh_ref[...] * end,
                                         axis=-1, keepdims=True)
        ll = score - log_z                                          # (TB, 1)
        # Lane-dense (TB, 128) store; wrapper reads column 0 of the valid rows.
        out_ref[...] = jnp.broadcast_to(ll, out_ref.shape)


@jax.jit
def crf_forward(logits, tags, mask_bool, transitions, start_t, end_t):
    """sum_b log P(y_b | x_b) for a linear-chain CRF (forward() of the module)."""
    B, T, L = logits.shape

    # Batch tile: multiple of 8 (sublane), capped at 128; pad B up to a multiple.
    TB = min(128, pl.cdiv(B, 8) * 8)
    B_pad = pl.cdiv(B, TB) * TB
    nb = B_pad // TB

    # TODO(synk): for bandwidth-bound v5e, logits could be shipped as bf16 and cast
    # in-kernel; kept f32 here to preserve the 1e-4 tolerance vs the f32 reference.
    logits_f = logits.astype(jnp.float32)
    mask_f = mask_bool.astype(jnp.float32)
    tags_i = tags.astype(jnp.int32)
    if B_pad != B:
        pad = B_pad - B
        logits_f = jnp.pad(logits_f, ((0, pad), (0, 0), (0, 0)))
        mask_f = jnp.pad(mask_f, ((0, pad), (0, 0)))           # padded rows: mask=0
        tags_i = jnp.pad(tags_i, ((0, pad), (0, 0)))

    # Time-major layouts: each grid step t gets a (TB, ...) tile with batch on
    # sublanes and labels on lanes (lane-dense for realistic L).
    logits_tm = jnp.transpose(logits_f, (1, 0, 2))             # (T, B_pad, L)
    tags_tm = jnp.transpose(tags_i, (1, 0))[:, :, None]        # (T, B_pad, 1)
    mask_tm = jnp.transpose(mask_f, (1, 0))[:, :, None]        # (T, B_pad, 1)

    out = pl.pallas_call(
        crf_kernel,
        out_shape=jax.ShapeDtypeStruct((B_pad, 128), jnp.float32),
        grid_spec=pltpu.PrefetchScalarGridSpec(
            num_scalar_prefetch=0,
            grid=(nb, T),
            in_specs=[
                pl.BlockSpec((1, TB, L), lambda b, t: (t, b, 0)),   # logits[t]
                pl.BlockSpec((1, TB, 1), lambda b, t: (t, b, 0)),   # tags[t]
                pl.BlockSpec((1, TB, 1), lambda b, t: (t, b, 0)),   # mask[t]
                pl.BlockSpec((L, L), lambda b, t: (0, 0)),          # transitions
                pl.BlockSpec((1, L), lambda b, t: (0, 0)),          # start
                pl.BlockSpec((1, L), lambda b, t: (0, 0)),          # end
            ],
            out_specs=pl.BlockSpec((TB, 128), lambda b, t: (b, 0)),
            scratch_shapes=[
                pltpu.VMEM((TB, L), jnp.float32),   # alpha (forward variables)
                pltpu.VMEM((TB, 1), jnp.float32),   # gold-path score accumulator
                pltpu.VMEM((TB, L), jnp.float32),   # one-hot of previous gold tag
                pltpu.VMEM((TB, L), jnp.float32),   # one-hot of last valid gold tag
                pltpu.VMEM((1, L), jnp.float32),    # column max of transitions
                pltpu.VMEM((L, L), jnp.float32),    # exp(trans - colmax)
            ],
        ),
        compiler_params=pltpu.CompilerParams(
            dimension_semantics=("parallel", "arbitrary"),
        ),
    )(
        logits_tm, tags_tm, mask_tm,
        transitions.astype(jnp.float32),
        start_t.reshape(1, L).astype(jnp.float32),
        end_t.reshape(1, L).astype(jnp.float32),
    )
    # Per-example log-likelihoods live in column 0; drop the batch padding rows.
    return jnp.sum(out[:B, 0])


def crf_forward_ref(logits, tags, mask_bool, transitions, start_t, end_t):
    """Pure-JAX reference mirroring the PyTorch module semantics."""
    B, T, L = logits.shape
    mask = mask_bool.astype(jnp.float32)

    # denominator
    alpha = start_t[None, :] + logits[:, 0, :]
    for i in range(1, T):
        inner = alpha[:, :, None] + logits[:, i, None, :] + transitions[None, :, :]
        new_alpha = jax.scipy.special.logsumexp(inner, axis=1)
        mi = mask[:, i][:, None]
        alpha = new_alpha * mi + alpha * (1.0 - mi)
    log_z = jax.scipy.special.logsumexp(alpha + end_t[None, :], axis=1)

    # numerator
    score = start_t[tags[:, 0]]
    for i in range(T - 1):
        cur, nxt = tags[:, i], tags[:, i + 1]
        trans_score = transitions[cur, nxt]
        emit_score = jnp.take_along_axis(logits[:, i, :], cur[:, None], axis=1)[:, 0]
        score = score + trans_score * mask[:, i + 1] + emit_score * mask[:, i]
    last_idx = jnp.sum(mask, axis=1).astype(jnp.int32) - 1
    last_tags = jnp.take_along_axis(tags, last_idx[:, None], axis=1)[:, 0]
    last_input = jnp.take_along_axis(logits[:, T - 1, :], last_tags[:, None], axis=1)[:, 0]
    score = score + end_t[last_tags] + last_input * mask[:, T - 1]

    return jnp.sum(score - log_z)


if __name__ == "__main__":
    B, T, L = 2, 8, 6
    key = jax.random.PRNGKey(0)
    k1, k2, k3, k4, k5 = jax.random.split(key, 5)

    # deterministic parameter init (mirrors reset_parameters):
    #   transitions ~ xavier_normal, start/end ~ normal(0, 1)
    transitions = jax.random.normal(k1, (L, L), jnp.float32) * jnp.sqrt(2.0 / (L + L))
    start_t = jax.random.normal(k2, (L,), jnp.float32)
    end_t = jax.random.normal(k3, (L,), jnp.float32)

    # inputs (mask must be a contiguous prefix with mask[:, 0] = True, as the
    # reference module assumes)
    logits = jax.random.normal(k4, (B, T, L), jnp.float32)
    tags = jax.random.randint(k5, (B, T), 0, L, jnp.int32)
    lengths = jnp.array([T, 5], dtype=jnp.int32)
    mask_bool = (jnp.arange(T)[None, :] < lengths[:, None])

    out = crf_forward(logits, tags, mask_bool, transitions, start_t, end_t)
    out = jax.block_until_ready(out)

    ref = crf_forward_ref(logits, tags, mask_bool, transitions, start_t, end_t)
    assert jnp.allclose(out, ref, rtol=1e-4, atol=1e-4), (out, ref)

    print("KERNEL_OK")
</pallas_src>

<mosaic_0001>
module attributes {stable_mosaic.version = 11 : i64} {
  func.func @crf_kernel(%arg0: i32, %arg1: i32, %arg2: memref<1x8x6xf32, #tpu.memory_space<vmem>>, %arg3: memref<1x8x1xi32, #tpu.memory_space<vmem>>, %arg4: memref<1x8x1xf32, #tpu.memory_space<vmem>>, %arg5: memref<6x6xf32, #tpu.memory_space<vmem>>, %arg6: memref<1x6xf32, #tpu.memory_space<vmem>>, %arg7: memref<1x6xf32, #tpu.memory_space<vmem>>, %arg8: memref<8x128xf32, #tpu.memory_space<vmem>>, %arg9: memref<8x6xf32, #tpu.memory_space<vmem>>, %arg10: memref<8x1xf32, #tpu.memory_space<vmem>>, %arg11: memref<8x6xf32, #tpu.memory_space<vmem>>, %arg12: memref<8x6xf32, #tpu.memory_space<vmem>>, %arg13: memref<1x6xf32, #tpu.memory_space<vmem>>, %arg14: memref<6x6xf32, #tpu.memory_space<vmem>>) attributes {dimension_semantics = [#tpu.dimension_semantics<parallel>, #tpu.dimension_semantics<arbitrary>], iteration_bounds = array<i64: 1, 8>, scalar_prefetch = 0 : i64, scratch_operands = 6 : i64, tpu.core_type = #tpu.core_type<tc>, window_params = [{transform_indices = @transform_0, window_bounds = array<i64: 1, 8, 6>}, {transform_indices = @transform_1, window_bounds = array<i64: 1, 8, 1>}, {transform_indices = @transform_2, window_bounds = array<i64: 1, 8, 1>}, {pipeline_mode = #tpu.pipeline_mode<synchronous>, transform_indices = @transform_3, window_bounds = array<i64: 6, 6>}, {pipeline_mode = #tpu.pipeline_mode<synchronous>, transform_indices = @transform_4, window_bounds = array<i64: 1, 6>}, {pipeline_mode = #tpu.pipeline_mode<synchronous>, transform_indices = @transform_5, window_bounds = array<i64: 1, 6>}, {transform_indices = @transform_6, window_bounds = array<i64: 8, 128>}]} {
    %c0 = arith.constant 0 : index
    %c0_0 = arith.constant 0 : index
    %c0_1 = arith.constant 0 : index
    %0 = vector.load %arg2[%c0, %c0_0, %c0_1] : memref<1x8x6xf32, #tpu.memory_space<vmem>>, vector<1x8x6xf32>
    %1 = vector.shape_cast %0 : vector<1x8x6xf32> to vector<8x6xf32>
    %c0_2 = arith.constant 0 : index
    %c0_3 = arith.constant 0 : index
    %c0_4 = arith.constant 0 : index
    %2 = vector.load %arg3[%c0_2, %c0_3, %c0_4] : memref<1x8x1xi32, #tpu.memory_space<vmem>>, vector<1x8x1xi32>
    %3 = vector.shape_cast %2 : vector<1x8x1xi32> to vector<8x1xi32>
    %c0_5 = arith.constant 0 : index
    %c0_6 = arith.constant 0 : index
    %c0_7 = arith.constant 0 : index
    %4 = vector.load %arg4[%c0_5, %c0_6, %c0_7] : memref<1x8x1xf32, #tpu.memory_space<vmem>>, vector<1x8x1xf32>
    %5 = vector.shape_cast %4 : vector<1x8x1xf32> to vector<8x1xf32>
    %c0_8 = arith.constant 0 : index
    %c0_9 = arith.constant 0 : index
    %6 = vector.load %arg6[%c0_8, %c0_9] : memref<1x6xf32, #tpu.memory_space<vmem>>, vector<1x6xf32>
    %c0_10 = arith.constant 0 : index
    %c0_11 = arith.constant 0 : index
    %7 = vector.load %arg7[%c0_10, %c0_11] : memref<1x6xf32, #tpu.memory_space<vmem>>, vector<1x6xf32>
    %c0_12 = arith.constant 0 : index
    %c0_13 = arith.constant 0 : index
    %8 = vector.load %arg5[%c0_12, %c0_13] : memref<6x6xf32, #tpu.memory_space<vmem>>, vector<6x6xf32>
    %9 = tpu.iota {dimensions = array<i32: 1>} : vector<8x6xi32>
    %10 = vector.broadcast %3 : vector<8x1xi32> to vector<8x6xi32>
    %11 = arith.cmpi eq, %10, %9 : vector<8x6xi32>
    %12 = arith.extui %11 : vector<8x6xi1> to vector<8x6xi32>
    %13 = arith.sitofp %12 : vector<8x6xi32> to vector<8x6xf32>
    %14 = arith.mulf %13, %1 : vector<8x6xf32>
    %cst = arith.constant dense<0.000000e+00> : vector<8xf32>
    %15 = vector.multi_reduction <add>, %14, %cst [1] : vector<8x6xf32> to vector<8xf32>
    %16 = vector.shape_cast %15 : vector<8xf32> to vector<8x1xf32>
    %c0_i32 = arith.constant 0 : i32
    %17 = arith.cmpi eq, %arg1, %c0_i32 : i32
    %18 = arith.extui %17 : i1 to i32
    %c0_i32_14 = arith.constant 0 : i32
    %19 = arith.cmpi ne, %18, %c0_i32_14 : i32
    scf.if %19 {
      %cst_18 = arith.constant dense<0xFF800000> : vector<6xf32>
      %26 = vector.multi_reduction <maximumf>, %8, %cst_18 [0] : vector<6x6xf32> to vector<6xf32>
      %27 = vector.shape_cast %26 : vector<6xf32> to vector<1x6xf32>
      %c0_19 = arith.constant 0 : index
      %c0_20 = arith.constant 0 : index
      %28 = vector.load %arg13[%c0_19, %c0_20] : memref<1x6xf32, #tpu.memory_space<vmem>>, vector<1x6xf32>
      tpu.vector_store %arg13[%c0_19, %c0_20], %27 {strides = array<i32>} : memref<1x6xf32, #tpu.memory_space<vmem>>, vector<1x6xf32>,
      %29 = vector.broadcast %27 : vector<1x6xf32> to vector<6x6xf32>
      %30 = arith.subf %8, %29 : vector<6x6xf32>
      %31 = math.exp %30 : vector<6x6xf32>
      %c0_21 = arith.constant 0 : index
      %c0_22 = arith.constant 0 : index
      %32 = vector.load %arg14[%c0_21, %c0_22] : memref<6x6xf32, #tpu.memory_space<vmem>>, vector<6x6xf32>
      tpu.vector_store %arg14[%c0_21, %c0_22], %31 {strides = array<i32>} : memref<6x6xf32, #tpu.memory_space<vmem>>, vector<6x6xf32>,
      %33 = vector.broadcast %6 : vector<1x6xf32> to vector<8x6xf32>
      %34 = arith.addf %33, %1 : vector<8x6xf32>
      %c0_23 = arith.constant 0 : index
      %c0_24 = arith.constant 0 : index
      %35 = vector.load %arg9[%c0_23, %c0_24] : memref<8x6xf32, #tpu.memory_space<vmem>>, vector<8x6xf32>
      tpu.vector_store %arg9[%c0_23, %c0_24], %34 {strides = array<i32>} : memref<8x6xf32, #tpu.memory_space<vmem>>, vector<8x6xf32>,
      %36 = vector.broadcast %6 : vector<1x6xf32> to vector<8x6xf32>
      %37 = arith.mulf %13, %36 : vector<8x6xf32>
      %cst_25 = arith.constant dense<0.000000e+00> : vector<8xf32>
      %38 = vector.multi_reduction <add>, %37, %cst_25 [1] : vector<8x6xf32> to vector<8xf32>
      %39 = vector.shape_cast %38 : vector<8xf32> to vector<8x1xf32>
      %40 = arith.mulf %16, %5 : vector<8x1xf32>
      %41 = arith.addf %39, %40 : vector<8x1xf32>
      %c0_26 = arith.constant 0 : index
      %c0_27 = arith.constant 0 : index
      %42 = vector.load %arg10[%c0_26, %c0_27] : memref<8x1xf32, #tpu.memory_space<vmem>>, vector<8x1xf32>
      tpu.vector_store %arg10[%c0_26, %c0_27], %41 {strides = array<i32>} : memref<8x1xf32, #tpu.memory_space<vmem>>, vector<8x1xf32>,
      %c0_28 = arith.constant 0 : index
      %c0_29 = arith.constant 0 : index
      %43 = vector.load %arg11[%c0_28, %c0_29] : memref<8x6xf32, #tpu.memory_space<vmem>>, vector<8x6xf32>
      tpu.vector_store %arg11[%c0_28, %c0_29], %13 {strides = array<i32>} : memref<8x6xf32, #tpu.memory_space<vmem>>, vector<8x6xf32>,
      %c0_30 = arith.constant 0 : index
      %c0_31 = arith.constant 0 : index
      %44 = vector.load %arg12[%c0_30, %c0_31] : memref<8x6xf32, #tpu.memory_space<vmem>>, vector<8x6xf32>
      tpu.vector_store %arg12[%c0_30, %c0_31], %13 {strides = array<i32>} : memref<8x6xf32, #tpu.memory_space<vmem>>, vector<8x6xf32>,
    } else {
    }
    %c0_i32_15 = arith.constant 0 : i32
    %20 = arith.cmpi sgt, %arg1, %c0_i32_15 : i32
    %21 = arith.extui %20 : i1 to i32
    %c0_i32_16 = arith.constant 0 : i32
    %22 = arith.cmpi ne, %21, %c0_i32_16 : i32
    scf.if %22 {
      %c0_18 = arith.constant 0 : index
      %c0_19 = arith.constant 0 : index
      %26 = vector.load %arg11[%c0_18, %c0_19] : memref<8x6xf32, #tpu.memory_space<vmem>>, vector<8x6xf32>
      %cst_20 = arith.constant dense<0.000000e+00> : vector<8x6xf32>
      %27 = tpu.matmul %26, %8, %cst_20 {dimension_numbers = #tpu.dot_dimension_numbers<[1], [0], [0], [1], [0, 0, 1, 1], [], []>} : vector<8x6xf32>, vector<6x6xf32>, vector<8x6xf32> -> vector<8x6xf32>
      %28 = arith.mulf %27, %13 : vector<8x6xf32>
      %cst_21 = arith.constant dense<0.000000e+00> : vector<8xf32>
      %29 = vector.multi_reduction <add>, %28, %cst_21 [1] : vector<8x6xf32> to vector<8xf32>
      %30 = vector.shape_cast %29 : vector<8xf32> to vector<8x1xf32>
      %c0_22 = arith.constant 0 : index
      %c0_23 = arith.constant 0 : index
      %31 = vector.load %arg10[%c0_22, %c0_23] : memref<8x1xf32, #tpu.memory_space<vmem>>, vector<8x1xf32>
      %32 = arith.addf %30, %16 : vector<8x1xf32>
      %33 = arith.mulf %32, %5 : vector<8x1xf32>
      %34 = arith.addf %31, %33 : vector<8x1xf32>
      %c0_24 = arith.constant 0 : index
      %c0_25 = arith.constant 0 : index
      %35 = vector.load %arg10[%c0_24, %c0_25] : memref<8x1xf32, #tpu.memory_space<vmem>>, vector<8x1xf32>
      tpu.vector_store %arg10[%c0_24, %c0_25], %34 {strides = array<i32>} : memref<8x1xf32, #tpu.memory_space<vmem>>, vector<8x1xf32>,
      %c0_26 = arith.constant 0 : index
      %c0_27 = arith.constant 0 : index
      %36 = vector.load %arg11[%c0_26, %c0_27] : memref<8x6xf32, #tpu.memory_space<vmem>>, vector<8x6xf32>
      tpu.vector_store %arg11[%c0_26, %c0_27], %13 {strides = array<i32>} : memref<8x6xf32, #tpu.memory_space<vmem>>, vector<8x6xf32>,
      %37 = vector.broadcast %5 : vector<8x1xf32> to vector<8x6xf32>
      %38 = arith.mulf %13, %37 : vector<8x6xf32>
      %c0_28 = arith.constant 0 : index
      %c0_29 = arith.constant 0 : index
      %39 = vector.load %arg12[%c0_28, %c0_29] : memref<8x6xf32, #tpu.memory_space<vmem>>, vector<8x6xf32>
      %cst_30 = arith.constant 1.000000e+00 : f32
      %40 = vector.broadcast %cst_30 : f32 to vector<8x1xf32>
      %41 = arith.subf %40, %5 : vector<8x1xf32>
      %42 = vector.broadcast %41 : vector<8x1xf32> to vector<8x6xf32>
      %43 = arith.mulf %39, %42 : vector<8x6xf32>
      %44 = arith.addf %38, %43 : vector<8x6xf32>
      %c0_31 = arith.constant 0 : index
      %c0_32 = arith.constant 0 : index
      %45 = vector.load %arg12[%c0_31, %c0_32] : memref<8x6xf32, #tpu.memory_space<vmem>>, vector<8x6xf32>
      tpu.vector_store %arg12[%c0_31, %c0_32], %44 {strides = array<i32>} : memref<8x6xf32, #tpu.memory_space<vmem>>, vector<8x6xf32>,
      %c0_33 = arith.constant 0 : index
      %c0_34 = arith.constant 0 : index
      %46 = vector.load %arg9[%c0_33, %c0_34] : memref<8x6xf32, #tpu.memory_space<vmem>>, vector<8x6xf32>
      %cst_35 = arith.constant dense<0xFF800000> : vector<8xf32>
      %47 = vector.multi_reduction <maximumf>, %46, %cst_35 [1] : vector<8x6xf32> to vector<8xf32>
      %48 = vector.shape_cast %47 : vector<8xf32> to vector<8x1xf32>
      %49 = vector.broadcast %48 : vector<8x1xf32> to vector<8x6xf32>
      %50 = arith.subf %46, %49 : vector<8x6xf32>
      %51 = math.exp %50 : vector<8x6xf32>
      %c0_36 = arith.constant 0 : index
      %c0_37 = arith.constant 0 : index
      %52 = vector.load %arg14[%c0_36, %c0_37] : memref<6x6xf32, #tpu.memory_space<vmem>>, vector<6x6xf32>
      %cst_38 = arith.constant dense<0.000000e+00> : vector<8x6xf32>
      %53 = tpu.matmul %51, %52, %cst_38 {dimension_numbers = #tpu.dot_dimension_numbers<[1], [0], [0], [1], [0, 0, 1, 1], [], []>} : vector<8x6xf32>, vector<6x6xf32>, vector<8x6xf32> -> vector<8x6xf32>
      %54 = vector.broadcast %48 : vector<8x1xf32> to vector<8x6xf32>
      %55 = arith.addf %1, %54 : vector<8x6xf32>
      %c0_39 = arith.constant 0 : index
      %c0_40 = arith.constant 0 : index
      %56 = vector.load %arg13[%c0_39, %c0_40] : memref<1x6xf32, #tpu.memory_space<vmem>>, vector<1x6xf32>
      %57 = vector.broadcast %56 : vector<1x6xf32> to vector<8x6xf32>
      %58 = arith.addf %55, %57 : vector<8x6xf32>
      %59 = math.log %53 : vector<8x6xf32>
      %60 = arith.addf %58, %59 : vector<8x6xf32>
      %61 = vector.broadcast %5 : vector<8x1xf32> to vector<8x6xf32>
      %62 = arith.mulf %60, %61 : vector<8x6xf32>
      %cst_41 = arith.constant 1.000000e+00 : f32
      %63 = vector.broadcast %cst_41 : f32 to vector<8x1xf32>
      %64 = arith.subf %63, %5 : vector<8x1xf32>
      %65 = vector.broadcast %64 : vector<8x1xf32> to vector<8x6xf32>
      %66 = arith.mulf %46, %65 : vector<8x6xf32>
      %67 = arith.addf %62, %66 : vector<8x6xf32>
      %c0_42 = arith.constant 0 : index
      %c0_43 = arith.constant 0 : index
      %68 = vector.load %arg9[%c0_42, %c0_43] : memref<8x6xf32, #tpu.memory_space<vmem>>, vector<8x6xf32>
      tpu.vector_store %arg9[%c0_42, %c0_43], %67 {strides = array<i32>} : memref<8x6xf32, #tpu.memory_space<vmem>>, vector<8x6xf32>,
    } else {
    }
    %c7_i32 = arith.constant 7 : i32
    %23 = arith.cmpi eq, %arg1, %c7_i32 : i32
    %24 = arith.extui %23 : i1 to i32
    %c0_i32_17 = arith.constant 0 : i32
    %25 = arith.cmpi ne, %24, %c0_i32_17 : i32
    scf.if %25 {
      %c0_18 = arith.constant 0 : index
      %c0_19 = arith.constant 0 : index
      %26 = vector.load %arg9[%c0_18, %c0_19] : memref<8x6xf32, #tpu.memory_space<vmem>>, vector<8x6xf32>
      %27 = vector.broadcast %7 : vector<1x6xf32> to vector<8x6xf32>
      %28 = arith.addf %26, %27 : vector<8x6xf32>
      %cst_20 = arith.constant dense<0xFF800000> : vector<8xf32>
      %29 = vector.multi_reduction <maximumf>, %28, %cst_20 [1] : vector<8x6xf32> to vector<8xf32>
      %30 = vector.shape_cast %29 : vector<8xf32> to vector<8x1xf32>
      %31 = vector.broadcast %30 : vector<8x1xf32> to vector<8x6xf32>
      %32 = arith.subf %28, %31 : vector<8x6xf32>
      %33 = math.exp %32 : vector<8x6xf32>
      %cst_21 = arith.constant dense<0.000000e+00> : vector<8xf32>
      %34 = vector.multi_reduction <add>, %33, %cst_21 [1] : vector<8x6xf32> to vector<8xf32>
      %35 = vector.shape_cast %34 : vector<8xf32> to vector<8x1xf32>
      %36 = math.log %35 : vector<8x1xf32>
      %37 = arith.addf %36, %30 : vector<8x1xf32>
      %c0_22 = arith.constant 0 : index
      %c0_23 = arith.constant 0 : index
      %38 = vector.load %arg10[%c0_22, %c0_23] : memref<8x1xf32, #tpu.memory_space<vmem>>, vector<8x1xf32>
      %c0_24 = arith.constant 0 : index
      %c0_25 = arith.constant 0 : index
      %39 = vector.load %arg12[%c0_24, %c0_25] : memref<8x6xf32, #tpu.memory_space<vmem>>, vector<8x6xf32>
      %40 = vector.broadcast %7 : vector<1x6xf32> to vector<8x6xf32>
      %41 = arith.mulf %39, %40 : vector<8x6xf32>
      %cst_26 = arith.constant dense<0.000000e+00> : vector<8xf32>
      %42 = vector.multi_reduction <add>, %41, %cst_26 [1] : vector<8x6xf32> to vector<8xf32>
      %43 = vector.shape_cast %42 : vector<8xf32> to vector<8x1xf32>
      %44 = arith.addf %38, %43 : vector<8x1xf32>
      %45 = arith.subf %44, %37 : vector<8x1xf32>
      %46 = vector.shape_cast %45 : vector<8x1xf32> to vector<8x1xf32>
      %47 = vector.broadcast %46 : vector<8x1xf32> to vector<8x128xf32>
      %c0_27 = arith.constant 0 : index
      %c0_28 = arith.constant 0 : index
      %48 = vector.load %arg8[%c0_27, %c0_28] : memref<8x128xf32, #tpu.memory_space<vmem>>, vector<8x128xf32>
      tpu.vector_store %arg8[%c0_27, %c0_28], %47 {strides = array<i32>} : memref<8x128xf32, #tpu.memory_space<vmem>>, vector<8x128xf32>,
    } else {
    }
    return
  }
  func.func @transform_0(%arg0: i32, %arg1: i32) -> (i32, i32, i32) {
    %c0_i32 = arith.constant 0 : i32
    %c0_i32_0 = arith.constant 0 : i32
    return %arg1, %arg0, %c0_i32 : i32, i32, i32
  }
  func.func @transform_1(%arg0: i32, %arg1: i32) -> (i32, i32, i32) {
    %c0_i32 = arith.constant 0 : i32
    %c0_i32_0 = arith.constant 0 : i32
    return %arg1, %arg0, %c0_i32 : i32, i32, i32
  }
  func.func @transform_2(%arg0: i32, %arg1: i32) -> (i32, i32, i32) {
    %c0_i32 = arith.constant 0 : i32
    %c0_i32_0 = arith.constant 0 : i32
    return %arg1, %arg0, %c0_i32 : i32, i32, i32
  }
  func.func @transform_3(%arg0: i32, %arg1: i32) -> (i32, i32) {
    %c0_i32 = arith.constant 0 : i32
    %c0_i32_0 = arith.constant 0 : i32
    %c0_i32_1 = arith.constant 0 : i32
    return %c0_i32, %c0_i32_0 : i32, i32
  }
  func.func @transform_4(%arg0: i32, %arg1: i32) -> (i32, i32) {
    %c0_i32 = arith.constant 0 : i32
    %c0_i32_0 = arith.constant 0 : i32
    %c0_i32_1 = arith.constant 0 : i32
    return %c0_i32, %c0_i32_0 : i32, i32
  }
  func.func @transform_5(%arg0: i32, %arg1: i32) -> (i32, i32) {
    %c0_i32 = arith.constant 0 : i32
    %c0_i32_0 = arith.constant 0 : i32
    %c0_i32_1 = arith.constant 0 : i32
    return %c0_i32, %c0_i32_0 : i32, i32
  }
  func.func @transform_6(%arg0: i32, %arg1: i32) -> (i32, i32) {
    %c0_i32 = arith.constant 0 : i32
    %c0_i32_0 = arith.constant 0 : i32
    return %arg0, %c0_i32 : i32, i32
  }
}

</mosaic_0001>

<llo_original>
// kernel: crf_forward.1
$region0: #{crf_forward.1}
  #allocation0 [shape = 'u32[]', space=smem, size = 0x4, offset = 0x4, fixed_abs, tag = 'smem constant byte address 0x4 - core index']
  #allocation1 [shape = 'u32[144,128]{1,0:T(1,128)}', space=vmem, size = 0x12000, scoped, tag = 'internal scratch']
  #allocation2 [shape = 'f32[8,6]{1,0:T(8,128)}', space=vmem, size = 0x1000, scoped, tag = 'scratch operand']
  #allocation3 [shape = 'f32[8,1]{1,0:T(8,128)}', space=vmem, size = 0x1000, scoped, tag = 'scratch operand']
  #allocation4 [shape = 'f32[8,6]{1,0:T(8,128)}', space=vmem, size = 0x1000, scoped, tag = 'scratch operand']
  #allocation5 [shape = 'f32[8,6]{1,0:T(8,128)}', space=vmem, size = 0x1000, scoped, tag = 'scratch operand']
  #allocation6 [shape = 'f32[1,6]{1,0:T(1,128)}', space=vmem, size = 0x200, scoped, tag = 'scratch operand']
  #allocation7 [shape = 'f32[6,6]{1,0:T(8,128)}', space=vmem, size = 0x1000, scoped, tag = 'scratch operand']
  %s0 = inlined_call_operand.vmem [shape: f32[8,8,6], index: 0, kind: input, shape index: {}]
  %s1 = inlined_call_operand.vmem [shape: s32[8,8,1], index: 1, kind: input, shape index: {}]
  %s2 = inlined_call_operand.vmem [shape: f32[8,8,1], index: 2, kind: input, shape index: {}]
  %s3 = inlined_call_operand.vmem [shape: f32[6,6], index: 3, kind: input, shape index: {}]
  %s4 = inlined_call_operand.vmem [shape: f32[1,6], index: 4, kind: input, shape index: {}]
  %s5 = inlined_call_operand.vmem [shape: f32[1,6], index: 5, kind: input, shape index: {}]
  %s6 = inlined_call_operand.vmem [shape: f32[8,128], index: 6, kind: output, shape index: {}]
  %s7 = sld [smem:[#allocation0]]
  $region69: #{crf_forward.1} parent=0
    _
  %s9 = ssub.s32 1, %s7
  %s10 = scalar_select 0, %s9, %s7
  loop: start=0, step=1, limit=10
  $region2: #{crf_forward.1} parent=0 // loop_pre_header
    _
  $region3: #{crf_forward.1} parent=0 // loop_header
    %s12 = sphi 0, %s16
    %p13 = scmp.ge.s32.totalorder %s12, 10
    %s19 = sphi 0, %s31
    %s20 = sphi 0, %s27
    %s21 = sphi 0, %s19
    %s22 = sphi 0, %s20
    %s23 = sphi 0, %s21
    %s24 = sphi 0, %s22
    %s36 = sphi 0, %s38
    %s39 = sphi 0, %s36
    %s40 = sphi 0, %s39
    %s56 = sphi 0, %s40
    %s64 = sphi 0, %s66
    %s67 = sphi 0, %s64
    %s68 = sphi 0, %s67
    %s84 = sphi 0, %s68
    %s92 = sphi 0, %s94
    %s95 = sphi 0, %s92
    %s96 = sphi 0, %s95
    %s112 = sphi 0, %s96
    %s116 = sphi 0, %s116
    %s118 = sphi 0, %s116
    %s119 = sphi 0, %s118
    %s133 = sphi 0, %s119
    %s137 = sphi 0, %s137
    %s139 = sphi 0, %s137
    %s140 = sphi 0, %s139
    %s154 = sphi 0, %s140
    %s158 = sphi 0, %s158
    %s160 = sphi 0, %s158
    %s161 = sphi 0, %s160
    %s175 = sphi 0, %s161
    %s181 = sphi 0, %s183
    %s184 = sphi 0, %s181
    %s185 = sphi 0, %s184
    %s201 = sphi 0, %s185
  $region4: #{crf_forward.1} parent=0 // loop_header_branch
    %15 = sbr.rel (%p13) target = $region8
  $region5: #{crf_forward.1} parent=0 // loop_body
    %s17 = ssub.s32 %s12, 1
    %s18 = ssub.s32 %s12, 2
    %s25 = sadd.s32 1, %s20
    %p26 = scmp.ge.s32.totalorder %s25, 8
    %s27 = scalar_select %p26, 0, %s25
    %s28 = sadd.s32 1, %s19
    %s29 = scalar_select %p26, %s28, %s19
    %p30 = scmp.ge.s32.totalorder %s29, 1
    %s31 = scalar_select %p30, 0, %s29
    %s32 = ssub.s32 %s20, %s27
    %s33 = ssub.s32 %s19, %s31
    %s34 = sor.u32 %s32, %s33
    %p35 = scmp.eq.s32.totalorder %s34, 0
    %s37 = sadd.s32 %s36, 1
    %s38 = scalar_select %p35, %s36, %s37
    %p41 = pneg %p35
    %p42 = scmp.eq.s32.totalorder %s12, 7
    %p43 = por %p41, %p42
    %p44 = scmp.ne.s32.totalorder %s36, %s39
    %p45 = scmp.eq.s32.totalorder %s12, 0
    %p46 = por %p44, %p45
    %p47 = scmp.ne.s32.totalorder %s36, %s39
    %p48 = scmp.eq.s32.totalorder %s17, 7
    %p49 = por %p47, %p48
    %p50 = scmp.ne.s32.totalorder %s39, %s40
    %p51 = scmp.eq.s32.totalorder %s17, 0
    %p52 = por %p50, %p51
    %p53 = scmp.ne.s32.totalorder %s39, %s40
    %p54 = scmp.eq.s32.totalorder %s18, 7
    %p55 = por %p53, %p54
    %p57 = scmp.ne.s32.totalorder %s40, %s56
    %p58 = scmp.eq.s32.totalorder %s18, 0
    %p59 = por %p57, %p58
    %s60 = ssub.s32 %s20, %s27
    %s61 = ssub.s32 %s19, %s31
    %s62 = sor.u32 %s60, %s61
    %p63 = scmp.eq.s32.totalorder %s62, 0
    %s65 = sadd.s32 %s64, 1
    %s66 = scalar_select %p63, %s64, %s65
    %p69 = pneg %p63
    %p70 = scmp.eq.s32.totalorder %s12, 7
    %p71 = por %p69, %p70
    %p72 = scmp.ne.s32.totalorder %s64, %s67
    %p73 = scmp.eq.s32.totalorder %s12, 0
    %p74 = por %p72, %p73
    %p75 = scmp.ne.s32.totalorder %s64, %s67
    %p76 = scmp.eq.s32.totalorder %s17, 7
    %p77 = por %p75, %p76
    %p78 = scmp.ne.s32.totalorder %s67, %s68
    %p79 = scmp.eq.s32.totalorder %s17, 0
    %p80 = por %p78, %p79
    %p81 = scmp.ne.s32.totalorder %s67, %s68
    %p82 = scmp.eq.s32.totalorder %s18, 7
    %p83 = por %p81, %p82
    %p85 = scmp.ne.s32.totalorder %s68, %s84
    %p86 = scmp.eq.s32.totalorder %s18, 0
    %p87 = por %p85, %p86
    %s88 = ssub.s32 %s20, %s27
    %s89 = ssub.s32 %s19, %s31
    %s90 = sor.u32 %s88, %s89
    %p91 = scmp.eq.s32.totalorder %s90, 0
    %s93 = sadd.s32 %s92, 1
    %s94 = scalar_select %p91, %s92, %s93
    %p97 = pneg %p91
    %p98 = scmp.eq.s32.totalorder %s12, 7
    %p99 = por %p97, %p98
    %p100 = scmp.ne.s32.totalorder %s92, %s95
    %p101 = scmp.eq.s32.totalorder %s12, 0
    %p102 = por %p100, %p101
    %p103 = scmp.ne.s32.totalorder %s92, %s95
    %p104 = scmp.eq.s32.totalorder %s17, 7
    %p105 = por %p103, %p104
    %p106 = scmp.ne.s32.totalorder %s95, %s96
    %p107 = scmp.eq.s32.totalorder %s17, 0
    %p108 = por %p106, %p107
    %p109 = scmp.ne.s32.totalorder %s95, %s96
    %p110 = scmp.eq.s32.totalorder %s18, 7
    %p111 = por %p109, %p110
    %p113 = scmp.ne.s32.totalorder %s96, %s112
    %p114 = scmp.eq.s32.totalorder %s18, 0
    %p115 = por %p113, %p114
    %s117 = sadd.s32 %s116, 1
    %p120 = scmp.eq.s32.totalorder %s12, 7
    %p121 = scmp.ne.s32.totalorder %s116, %s118
    %p122 = scmp.eq.s32.totalorder %s12, 0
    %p123 = por %p121, %p122
    %p124 = scmp.ne.s32.totalorder %s116, %s118
    %p125 = scmp.eq.s32.totalorder %s17, 7
    %p126 = por %p124, %p125
    %p127 = scmp.ne.s32.totalorder %s118, %s119
    %p128 = scmp.eq.s32.totalorder %s17, 0
    %p129 = por %p127, %p128
    %p130 = scmp.ne.s32.totalorder %s118, %s119
    %p131 = scmp.eq.s32.totalorder %s18, 7
    %p132 = por %p130, %p131
    %p134 = scmp.ne.s32.totalorder %s119, %s133
    %p135 = scmp.eq.s32.totalorder %s18, 0
    %p136 = por %p134, %p135
    %s138 = sadd.s32 %s137, 1
    %p141 = scmp.eq.s32.totalorder %s12, 7
    %p142 = scmp.ne.s32.totalorder %s137, %s139
    %p143 = scmp.eq.s32.totalorder %s12, 0
    %p144 = por %p142, %p143
    %p145 = scmp.ne.s32.totalorder %s137, %s139
    %p146 = scmp.eq.s32.totalorder %s17, 7
    %p147 = por %p145, %p146
    %p148 = scmp.ne.s32.totalorder %s139, %s140
    %p149 = scmp.eq.s32.totalorder %s17, 0
    %p150 = por %p148, %p149
    %p151 = scmp.ne.s32.totalorder %s139, %s140
    %p152 = scmp.eq.s32.totalorder %s18, 7
    %p153 = por %p151, %p152
    %p155 = scmp.ne.s32.totalorder %s140, %s154
    %p156 = scmp.eq.s32.totalorder %s18, 0
    %p157 = por %p155, %p156
    %s159 = sadd.s32 %s158, 1
    %p162 = scmp.eq.s32.totalorder %s12, 7
    %p163 = scmp.ne.s32.totalorder %s158, %s160
    %p164 = scmp.eq.s32.totalorder %s12, 0
    %p165 = por %p163, %p164
    %p166 = scmp.ne.s32.totalorder %s158, %s160
    %p167 = scmp.eq.s32.totalorder %s17, 7
    %p168 = por %p166, %p167
    %p169 = scmp.ne.s32.totalorder %s160, %s161
    %p170 = scmp.eq.s32.totalorder %s17, 0
    %p171 = por %p169, %p170
    %p172 = scmp.ne.s32.totalorder %s160, %s161
    %p173 = scmp.eq.s32.totalorder %s18, 7
    %p174 = por %p172, %p173
    %p176 = scmp.ne.s32.totalorder %s161, %s175
    %p177 = scmp.eq.s32.totalorder %s18, 0
    %p178 = por %p176, %p177
    %s179 = ssub.s32 %s19, %s31
    %p180 = scmp.eq.s32.totalorder %s179, 0
    %s182 = sadd.s32 %s181, 1
    %s183 = scalar_select %p180, %s181, %s182
    %p186 = pneg %p180
    %p187 = scmp.eq.s32.totalorder %s12, 7
    %p188 = por %p186, %p187
    %p189 = scmp.ne.s32.totalorder %s181, %s184
    %p190 = scmp.eq.s32.totalorder %s12, 0
    %p191 = por %p189, %p190
    %p192 = scmp.ne.s32.totalorder %s181, %s184
    %p193 = scmp.eq.s32.totalorder %s17, 7
    %p194 = por %p192, %p193
    %p195 = scmp.ne.s32.totalorder %s184, %s185
    %p196 = scmp.eq.s32.totalorder %s17, 0
    %p197 = por %p195, %p196
    %p198 = scmp.ne.s32.totalorder %s184, %s185
    %p199 = scmp.eq.s32.totalorder %s18, 7
    %p200 = por %p198, %p199
    %p202 = scmp.ne.s32.totalorder %s185, %s201
    %p203 = scmp.eq.s32.totalorder %s18, 0
    %p204 = por %p202, %p203
    %p205 = scmp.le.s32.totalorder 1, %s12
    %p206 = scmp.lt.s32.totalorder %s12, 9
    %p207 = pnand %p205, %p206
    %p208 = pneg %p207
    // Predicated region
    $region9: #{crf_forward.1} parent=5 // pred_check
      _
    $region10: #{crf_forward.1} parent=5 // pred_check_branch
      %210 = sbr.rel (%p207) target = $region12
    $region11: #{crf_forward.1} parent=5 // pred_region
      %s211 = ssub.s32 %s12, 1
      // Predicated region
      $region13: #{crf_forward.1} parent=11 // pred_check
        %p212 = pneg %p129
      $region14: #{crf_forward.1} parent=11 // pred_check_branch
        %214 = sbr.rel (%p212) target = $region16
      $region15: #{crf_forward.1} parent=11 // pred_region
        _
      $region16: #{crf_forward.1} parent=11 // pred_fallthru
        _
      // Predicated region
      $region17: #{crf_forward.1} parent=11 // pred_check
        %p215 = pneg %p150
      $region18: #{crf_forward.1} parent=11 // pred_check_branch
        %217 = sbr.rel (%p215) target = $region20
      $region19: #{crf_forward.1} parent=11 // pred_region
        _
      $region20: #{crf_forward.1} parent=11 // pred_fallthru
        _
      // Predicated region
      $region21: #{crf_forward.1} parent=11 // pred_check
        %p218 = pneg %p171
      $region22: #{crf_forward.1} parent=11 // pred_check_branch
        %220 = sbr.rel (%p218) target = $region24
      $region23: #{crf_forward.1} parent=11 // pred_region
        _
      $region24: #{crf_forward.1} parent=11 // pred_fallthru
        _
    $region12: #{crf_forward.1} parent=5 // pred_fallthru
      _
    %p221 = scmp.lt.s32.totalorder %s12, 8
    // Predicated region
    $region25: #{crf_forward.1} parent=5 // pred_check
      %p222 = pneg %p221
    $region26: #{crf_forward.1} parent=5 // pred_check_branch
      %224 = sbr.rel (%p222) target = $region28
    $region27: #{crf_forward.1} parent=5 // pred_region
      // Predicated region
      $region29: #{crf_forward.1} parent=27 // pred_check
        %p225 = pneg %p46
      $region30: #{crf_forward.1} parent=27 // pred_check_branch
        %227 = sbr.rel (%p225) target = $region32
      $region31: #{crf_forward.1} parent=27 // pred_region
        %p228 = scmp.lt.s32.totalorder %s20, 7
        %s229 = scalar_select %p228, %s20, 7
        %p230 = scmp.lt.s32.totalorder %s19, 0
        %s231 = scalar_select %p230, %s19, 0
        %s232 = sadd.s32 %s231, %s229
        %s233 = smul.addr %s232, 8
        %s234 = scalar_lea.vmem %s0, %s233
      $region32: #{crf_forward.1} parent=27 // pred_fallthru
        _
      // Predicated region
      $region33: #{crf_forward.1} parent=27 // pred_check
        %p235 = pneg %p74
      $region34: #{crf_forward.1} parent=27 // pred_check_branch
        %237 = sbr.rel (%p235) target = $region36
      $region35: #{crf_forward.1} parent=27 // pred_region
        %p238 = scmp.lt.s32.totalorder %s20, 7
        %s239 = scalar_select %p238, %s20, 7
        %p240 = scmp.lt.s32.totalorder %s19, 0
        %s241 = scalar_select %p240, %s19, 0
        %s242 = sadd.s32 %s241, %s239
        %s243 = smul.addr %s242, 8
        %s244 = scalar_lea.vmem %s1, %s243
      $region36: #{crf_forward.1} parent=27 // pred_fallthru
        _
      // Predicated region
      $region37: #{crf_forward.1} parent=27 // pred_check
        %p245 = pneg %p102
      $region38: #{crf_forward.1} parent=27 // pred_check_branch
        %247 = sbr.rel (%p245) target = $region40
      $region39: #{crf_forward.1} parent=27 // pred_region
        %p248 = scmp.lt.s32.totalorder %s20, 7
        %s249 = scalar_select %p248, %s20, 7
        %p250 = scmp.lt.s32.totalorder %s19, 0
        %s251 = scalar_select %p250, %s19, 0
        %s252 = sadd.s32 %s251, %s249
        %s253 = smul.addr %s252, 8
        %s254 = scalar_lea.vmem %s2, %s253
      $region40: #{crf_forward.1} parent=27 // pred_fallthru
        _
    $region28: #{crf_forward.1} parent=5 // pred_fallthru
      _
    %p255 = scmp.le.s32.totalorder 1, %s12
    %p256 = scmp.lt.s32.totalorder %s12, 9
    %p257 = pnand %p255, %p256
    %p258 = pneg %p257
    // Predicated region
    $region41: #{crf_forward.1} parent=5 // pred_check
      _
    $region42: #{crf_forward.1} parent=5 // pred_check_branch
      %260 = sbr.rel (%p257) target = $region44
    $region43: #{crf_forward.1} parent=5 // pred_region
      %s261 = ssub.s32 %s12, 1
      %p262 = scmp.lt.s32.totalorder %s22, 7
      %s263 = scalar_select %p262, %s22, 7
      %p264 = scmp.lt.s32.totalorder %s21, 0
      %s265 = scalar_select %p264, %s21, 0
      %s266 = sadd.s32 %s265, %s263
      %s267 = smul.addr %s266, 8
      %s268 = scalar_lea.vmem %s0, %s267
      %p269 = pneg %p52
      %p270 = pneg %p49
      %p271 = scmp.lt.s32.totalorder %s22, 7
      %s272 = scalar_select %p271, %s22, 7
      %p273 = scmp.lt.s32.totalorder %s21, 0
      %s274 = scalar_select %p273, %s21, 0
      %s275 = sadd.s32 %s274, %s272
      %s276 = smul.addr %s275, 8
      %s277 = scalar_lea.vmem %s1, %s276
      %p278 = pneg %p80
      %p279 = pneg %p77
      %p280 = scmp.lt.s32.totalorder %s22, 7
      %s281 = scalar_select %p280, %s22, 7
      %p282 = scmp.lt.s32.totalorder %s21, 0
      %s283 = scalar_select %p282, %s21, 0
      %s284 = sadd.s32 %s283, %s281
      %s285 = smul.addr %s284, 8
      %s286 = scalar_lea.vmem %s2, %s285
      %p287 = pneg %p108
      %p288 = pneg %p105
      %p289 = pneg %p129
      %p290 = pneg %p126
      %p291 = pneg %p150
      %p292 = pneg %p147
      %p293 = pneg %p171
      %p294 = pneg %p168
      %p295 = pneg %p197
      %p296 = pneg %p194
      %p297 = scmp.lt.s32.totalorder %s21, 0
      %s298 = scalar_select %p297, %s21, 0
      %s299 = smul.addr %s298, 8
      %s300 = scalar_lea.vmem %s6, %s299
      %p301 = scmp.lt.s32.totalorder %s22, 7
      %s302 = scalar_select %p301, %s22, 7
      %p303 = scmp.lt.s32.totalorder %s21, 0
      %s304 = scalar_select %p303, %s21, 0
      %s305 = sadd.s32 %s304, %s302
      %s306 = smul.addr %s305, 8
      %s307 = scalar_lea.vmem %s0, %s306
      %p308 = scmp.lt.s32.totalorder %s22, 7
      %s309 = scalar_select %p308, %s22, 7
      %p310 = scmp.lt.s32.totalorder %s21, 0
      %s311 = scalar_select %p310, %s21, 0
      %s312 = sadd.s32 %s311, %s309
      %s313 = smul.addr %s312, 8
      %s314 = scalar_lea.vmem %s1, %s313
      %p315 = scmp.lt.s32.totalorder %s22, 7
      %s316 = scalar_select %p315, %s22, 7
      %p317 = scmp.lt.s32.totalorder %s21, 0
      %s318 = scalar_select %p317, %s21, 0
      %s319 = sadd.s32 %s318, %s316
      %s320 = smul.addr %s319, 8
      %s321 = scalar_lea.vmem %s2, %s320
      %p322 = scmp.lt.s32.totalorder %s21, 0
      %s323 = scalar_select %p322, %s21, 0
      %s324 = smul.addr %s323, 8
      %s325 = scalar_lea.vmem %s6, %s324
      %v326 = vld [vmem:[%s307] sm:$0xff]
      %v327 = vld [vmem:[%s314] sm:$0xff]
      %v328 = vld [vmem:[%s321] sm:$0xff]
      %v329 = vld [vmem:[%s4] sm:$0x1]
      %v330 = vld [vmem:[%s5] sm:$0x1]
      %v331 = vld [vmem:[%s3] sm:$0x3f]
      %v332 = vlaneseq
      %v333 = vand.u32 %v332, 127
      %334 = vset.pattern.permute.xlu0 0
      %335 = vperm.xlu0 %334, %v327
      %v336 = vpop.permute.xlu0 %335
      %vm337 = vcmp.eq.s32.totalorder %v336, %v333
      %v338 = vsel %vm337, 1, 0
      %v339 = vcvt.s32.f32 %v338
      %v340 = vmul.f32 %v339, %v326
      %vm341 = vcmask 48128
      %v342 = vsel %vm341, %v340, 0.0
      %343 = vadd.xlane.f32.xlu0 %v342
      %v344 = vpop.xlane.xlu0 %343
      %p345 = scmp.eq.s32.totalorder %s22, 0
      // Predicated region
      $region45: #{crf_forward.1} parent=43 // pred_check
        %p346 = pneg %p345
      $region46: #{crf_forward.1} parent=43 // pred_check_branch
        %348 = sbr.rel (%p346) target = $region48
      $region47: #{crf_forward.1} parent=43 // pred_region
        %vm349 = vcmask 46080
        %v350 = vsel %vm349, %v331, -inf
        %v351 = vrot.slane %v350, 4
        %v352 = vmax.f32 %v350, %v351
        %v353 = vrot.slane %v352, 2
        %v354 = vmax.f32 %v352, %v353
        %v355 = vrot.slane %v354, 1
        %v356 = vmax.f32 %v354, %v355
        %vm357 = vcmask 40960
        %358 = vst.msk [vmem:[#allocation6] sm:$0x1] %vm357, %v356
        %v359 = vsub.f32 %v331, %v356
        %v360 = vmul.f32 %v359, 1.442695
        %v361 = vpow.pop %v360
        %362 = vst.msk [vmem:[#allocation7] sm:$0x3f] %vm349, %v361
        %v364 = vlaneseq
        %v365 = vshrl.u32 %v364, 7
        %v366 = vsub.s32 0, %v365
        %v367 = vrot.slane %v329, %v366
        %v369 = vadd.f32 %v367, %v326
        %370 = vst.msk [vmem:[#allocation2] sm:$0xff] %vm341, %v369
        %v371 = vmul.f32 %v339, %v367
        %v372 = vsel %vm341, %v371, 0.0
        %373 = vadd.xlane.f32.xlu0 %v372
        %v374 = vpop.xlane.xlu0 %373
        %v375 = vmul.f32 %v344, %v328
        %v376 = vadd.f32 %v374, %v375
        %vm377 = vcmask 7168
        %378 = vst.msk [vmem:[#allocation3] sm:$0xff] %vm377, %v376
        %379 = vst.msk [vmem:[#allocation4] sm:$0xff] %vm341, %v339
        %380 = vst.msk [vmem:[#allocation5] sm:$0xff] %vm341, %v339
      $region48: #{crf_forward.1} parent=43 // pred_fallthru
        _
      %p381 = scmp.gt.s32.totalorder %s22, 0
      // Predicated region
      $region49: #{crf_forward.1} parent=43 // pred_check
        %p382 = pneg %p381
      $region50: #{crf_forward.1} parent=43 // pred_check_branch
        %384 = sbr.rel (%p382) target = $region52
      $region51: #{crf_forward.1} parent=43 // pred_region
        %v385 = vld [vmem:[#allocation4] sm:$0xff]
        %v387 = vsel %vm341, %v385, 0
        %vm389 = vcmask 1045504
        %v391 = vsel %vm389, %v331, 0
        %393 = vmatprep.subr.mxu0 0.0
        %394 = vmatpush1.msra.mxu0 0.0
        %395 = vmatprep.subr.mxu0 0.0
        %396 = vmatpush1.msra.mxu0 0.0
        %397 = vmatprep.subr.mxu0 0.0
        %398 = vmatpush1.msra.mxu0 0.0
        %399 = vmatprep.subr.mxu0 0.0
        %400 = vmatpush1.msra.mxu0 0.0
        %401 = vmatprep.subr.mxu0 0.0
        %402 = vmatpush1.msra.mxu0 0.0
        %403 = vmatprep.subr.mxu0 0.0
        %404 = vmatpush1.msra.mxu0 0.0
        %405 = vmatprep.subr.mxu0 0.0
        %406 = vmatpush1.msra.mxu0 0.0
        %407 = vmatprep.subr.mxu0 0.0
        %408 = vmatpush1.msra.mxu0 0.0
        %409 = vmatprep.subr.mxu0 0.0
        %410 = vmatpush1.msra.mxu0 0.0
        %411 = vmatprep.subr.mxu0 0.0
        %412 = vmatpush1.msra.mxu0 0.0
        %413 = vmatprep.subr.mxu0 0.0
        %414 = vmatpush1.msra.mxu0 0.0
        %415 = vmatprep.subr.mxu0 0.0
        %416 = vmatpush1.msra.mxu0 0.0
        %417 = vmatprep.subr.mxu0 0.0
        %418 = vmatpush1.msra.mxu0 0.0
        %419 = vmatprep.subr.mxu0 0.0
        %420 = vmatpush1.msra.mxu0 0.0
        %421 = vmatprep.subr.mxu0 0.0
        %422 = vmatpush1.msra.mxu0 0.0
        %423 = vmatprep.subr.mxu0 0.0
        %424 = vmatpush1.msra.mxu0 %v391
        %425 = vmatprep.subr.mxu0 0.0
        %426 = vmatpush2.msra.mxu0 0.0
        %427 = vmatprep.subr.mxu0 0.0
        %428 = vmatpush2.msra.mxu0 0.0
        %429 = vmatprep.subr.mxu0 0.0
        %430 = vmatpush2.msra.mxu0 0.0
        %431 = vmatprep.subr.mxu0 0.0
        %432 = vmatpush2.msra.mxu0 0.0
        %433 = vmatprep.subr.mxu0 0.0
        %434 = vmatpush2.msra.mxu0 0.0
        %435 = vmatprep.subr.mxu0 0.0
        %436 = vmatpush2.msra.mxu0 0.0
        %437 = vmatprep.subr.mxu0 0.0
        %438 = vmatpush2.msra.mxu0 0.0
        %439 = vmatprep.subr.mxu0 0.0
        %440 = vmatpush2.msra.mxu0 0.0
        %441 = vmatprep.subr.mxu0 0.0
        %442 = vmatpush2.msra.mxu0 0.0
        %443 = vmatprep.subr.mxu0 0.0
        %444 = vmatpush2.msra.mxu0 0.0
        %445 = vmatprep.subr.mxu0 0.0
        %446 = vmatpush2.msra.mxu0 0.0
        %447 = vmatprep.subr.mxu0 0.0
        %448 = vmatpush2.msra.mxu0 0.0
        %449 = vmatprep.subr.mxu0 0.0
        %450 = vmatpush2.msra.mxu0 0.0
        %451 = vmatprep.subr.mxu0 0.0
        %452 = vmatpush2.msra.mxu0 0.0
        %453 = vmatprep.subr.mxu0 0.0
        %454 = vmatpush2.msra.mxu0 0.0
        %455 = vmatprep.subr.mxu0 0.0
        %456 = vmatpush2.msra.mxu0 0.0
        %457 = vmatprep.mubr.f32.mxu0 0.0
        %458 = vmatmul.mubr.f32.gmra.mxu0 %v387
        %v459 = vpop.f32.mrf.mxu0
        %v460 = vadd.f32 0.0, %v459
        %v461 = vpop.f32.mrf.mxu0
        %462 = vdwg.mxu0
        %v463 = vmul.f32 %v460, %v339
        %v464 = vsel %vm341, %v463, 0.0
        %465 = vadd.xlane.f32.xlu0 %v464
        %v466 = vpop.xlane.xlu0 %465
        %v467 = vld [vmem:[#allocation3] sm:$0xff]
        %v468 = vadd.f32 %v466, %v344
        %v469 = vmul.f32 %v468, %v328
        %v470 = vadd.f32 %v467, %v469
        %vm471 = vcmask 7168
        %472 = vst.msk [vmem:[#allocation3] sm:$0xff] %vm471, %v470
        %473 = vst.msk [vmem:[#allocation4] sm:$0xff] %vm341, %v339
        %475 = vset.pattern.permute.xlu0 0
        %476 = vperm.xlu0 %475, %v328
        %v477 = vpop.permute.xlu0 %476
        %v479 = vmul.f32 %v339, %v477
        %v480 = vld [vmem:[#allocation5] sm:$0xff]
        %v481 = vsub.f32 1.0, %v328
        %483 = vset.pattern.permute.xlu0 0
        %484 = vperm.xlu0 %483, %v481
        %v485 = vpop.permute.xlu0 %484
        %v487 = vmul.f32 %v480, %v485
        %v488 = vadd.f32 %v479, %v487
        %489 = vst.msk [vmem:[#allocation5] sm:$0xff] %vm341, %v488
        %v490 = vld [vmem:[#allocation2] sm:$0xff]
        %v491 = vsel %vm341, %v490, -inf
        %492 = vmax.xlane.f32.xlu0 %v491
        %v493 = vpop.xlane.xlu0 %492
        %v494 = vsub.f32 %v490, %v493
        %v495 = vmul.f32 %v494, 1.442695
        %v496 = vpow.pop %v495
        %v497 = vld [vmem:[#allocation7] sm:$0x3f]
        %v499 = vsel %vm341, %v496, 0
        %v502 = vsel %vm389, %v497, 0
        %504 = vmatprep.subr.mxu0 0.0
        %505 = vmatpush1.msra.mxu0 0.0
        %506 = vmatprep.subr.mxu0 0.0
        %507 = vmatpush1.msra.mxu0 0.0
        %508 = vmatprep.subr.mxu0 0.0
        %509 = vmatpush1.msra.mxu0 0.0
        %510 = vmatprep.subr.mxu0 0.0
        %511 = vmatpush1.msra.mxu0 0.0
        %512 = vmatprep.subr.mxu0 0.0
        %513 = vmatpush1.msra.mxu0 0.0
        %514 = vmatprep.subr.mxu0 0.0
        %515 = vmatpush1.msra.mxu0 0.0
        %516 = vmatprep.subr.mxu0 0.0
        %517 = vmatpush1.msra.mxu0 0.0
        %518 = vmatprep.subr.mxu0 0.0
        %519 = vmatpush1.msra.mxu0 0.0
        %520 = vmatprep.subr.mxu0 0.0
        %521 = vmatpush1.msra.mxu0 0.0
        %522 = vmatprep.subr.mxu0 0.0
        %523 = vmatpush1.msra.mxu0 0.0
        %524 = vmatprep.subr.mxu0 0.0
        %525 = vmatpush1.msra.mxu0 0.0
        %526 = vmatprep.subr.mxu0 0.0
        %527 = vmatpush1.msra.mxu0 0.0
        %528 = vmatprep.subr.mxu0 0.0
        %529 = vmatpush1.msra.mxu0 0.0
        %530 = vmatprep.subr.mxu0 0.0
        %531 = vmatpush1.msra.mxu0 0.0
        %532 = vmatprep.subr.mxu0 0.0
        %533 = vmatpush1.msra.mxu0 0.0
        %534 = vmatprep.subr.mxu0 0.0
        %535 = vmatpush1.msra.mxu0 %v502
        %536 = vmatprep.subr.mxu0 0.0
        %537 = vmatpush2.msra.mxu0 0.0
        %538 = vmatprep.subr.mxu0 0.0
        %539 = vmatpush2.msra.mxu0 0.0
        %540 = vmatprep.subr.mxu0 0.0
        %541 = vmatpush2.msra.mxu0 0.0
        %542 = vmatprep.subr.mxu0 0.0
        %543 = vmatpush2.msra.mxu0 0.0
        %544 = vmatprep.subr.mxu0 0.0
        %545 = vmatpush2.msra.mxu0 0.0
        %546 = vmatprep.subr.mxu0 0.0
        %547 = vmatpush2.msra.mxu0 0.0
        %548 = vmatprep.subr.mxu0 0.0
        %549 = vmatpush2.msra.mxu0 0.0
        %550 = vmatprep.subr.mxu0 0.0
        %551 = vmatpush2.msra.mxu0 0.0
        %552 = vmatprep.subr.mxu0 0.0
        %553 = vmatpush2.msra.mxu0 0.0
        %554 = vmatprep.subr.mxu0 0.0
        %555 = vmatpush2.msra.mxu0 0.0
        %556 = vmatprep.subr.mxu0 0.0
        %557 = vmatpush2.msra.mxu0 0.0
        %558 = vmatprep.subr.mxu0 0.0
        %559 = vmatpush2.msra.mxu0 0.0
        %560 = vmatprep.subr.mxu0 0.0
        %561 = vmatpush2.msra.mxu0 0.0
        %562 = vmatprep.subr.mxu0 0.0
        %563 = vmatpush2.msra.mxu0 0.0
        %564 = vmatprep.subr.mxu0 0.0
        %565 = vmatpush2.msra.mxu0 0.0
        %566 = vmatprep.subr.mxu0 0.0
        %567 = vmatpush2.msra.mxu0 0.0
        %568 = vmatprep.mubr.f32.mxu0 0.0
        %569 = vmatmul.mubr.f32.gmra.mxu0 %v499
        %v570 = vpop.f32.mrf.mxu0
        %v571 = vadd.f32 0.0, %v570
        %v572 = vpop.f32.mrf.mxu0
        %573 = vdwg.mxu0
        %v574 = vadd.f32 %v326, %v493
        %v575 = vld [vmem:[#allocation6] sm:$0x1]
        %v577 = vlaneseq
        %v578 = vshrl.u32 %v577, 7
        %v579 = vsub.s32 0, %v578
        %v580 = vrot.slane %v575, %v579
        %v582 = vadd.f32 %v574, %v580
        %v583 = vlog2.pop %v571
        %v584 = vmul.f32 %v583, 0.6931472
        %v585 = vadd.f32 %v582, %v584
        %v586 = vmul.f32 %v585, %v477
        %v587 = vmul.f32 %v490, %v485
        %v588 = vadd.f32 %v586, %v587
        %589 = vst.msk [vmem:[#allocation2] sm:$0xff] %vm341, %v588
      $region52: #{crf_forward.1} parent=43 // pred_fallthru
        _
      %p590 = scmp.eq.s32.totalorder %s22, 7
      // Predicated region
      $region53: #{crf_forward.1} parent=43 // pred_check
        %p591 = pneg %p590
      $region54: #{crf_forward.1} parent=43 // pred_check_branch
        %593 = sbr.rel (%p591) target = $region56
      $region55: #{crf_forward.1} parent=43 // pred_region
        %v594 = vld [vmem:[#allocation2] sm:$0xff]
        %v596 = vlaneseq
        %v597 = vshrl.u32 %v596, 7
        %v598 = vsub.s32 0, %v597
        %v599 = vrot.slane %v330, %v598
        %v601 = vadd.f32 %v594, %v599
        %v602 = vsel %vm341, %v601, -inf
        %603 = vmax.xlane.f32.xlu0 %v602
        %v604 = vpop.xlane.xlu0 %603
        %v605 = vsub.f32 %v601, %v604
        %v606 = vmul.f32 %v605, 1.442695
        %v607 = vpow.pop %v606
        %v608 = vsel %vm341, %v607, 0.0
        %609 = vadd.xlane.f32.xlu0 %v608
        %v610 = vpop.xlane.xlu0 %609
        %v611 = vlog2.pop %v610
        %v612 = vmul.f32 %v611, 0.6931472
        %v613 = vadd.f32 %v612, %v604
        %v614 = vld [vmem:[#allocation3] sm:$0xff]
        %v615 = vld [vmem:[#allocation5] sm:$0xff]
        %v616 = vmul.f32 %v615, %v599
        %v617 = vsel %vm341, %v616, 0.0
        %618 = vadd.xlane.f32.xlu0 %v617
        %v619 = vpop.xlane.xlu0 %618
        %v620 = vadd.f32 %v614, %v619
        %v621 = vsub.f32 %v620, %v613
        %623 = vset.pattern.permute.xlu0 0
        %624 = vperm.xlu0 %623, %v621
        %v625 = vpop.permute.xlu0 %624
        %627 = vst [vmem:[%s325] sm:$0xff] %v625
      $region56: #{crf_forward.1} parent=43 // pred_fallthru
        _
      %p628 = scmp.lt.s32.totalorder %s21, 0
      %s629 = scalar_select %p628, %s21, 0
      %s630 = smul.addr %s629, 8
      %s631 = scalar_lea.vmem %s6, %s630
      // Predicated region
      $region57: #{crf_forward.1} parent=43 // pred_check
        %p632 = pneg %p194
      $region58: #{crf_forward.1} parent=43 // pred_check_branch
        %634 = sbr.rel (%p632) target = $region60
      $region59: #{crf_forward.1} parent=43 // pred_region
        _
      $region60: #{crf_forward.1} parent=43 // pred_fallthru
        _
      // Predicated region
      $region61: #{crf_forward.1} parent=43 // pred_check
        %p635 = pneg %p194
      $region62: #{crf_forward.1} parent=43 // pred_check_branch
        %637 = sbr.rel (%p635) target = $region64
      $region63: #{crf_forward.1} parent=43 // pred_region
        %p638 = scmp.lt.s32.totalorder %s21, 0
        %s639 = scalar_select %p638, %s21, 0
        %s640 = smul.addr %s639, 8
        %s641 = scalar_lea.vmem %s6, %s640
      $region64: #{crf_forward.1} parent=43 // pred_fallthru
        _
    $region44: #{crf_forward.1} parent=5 // pred_fallthru
      _
    %p642 = scmp.le.s32.totalorder 2, %s12
    // Predicated region
    $region65: #{crf_forward.1} parent=5 // pred_check
      %p643 = pneg %p642
    $region66: #{crf_forward.1} parent=5 // pred_check_branch
      %645 = sbr.rel (%p643) target = $region68
    $region67: #{crf_forward.1} parent=5 // pred_region
      %s646 = ssub.s32 %s12, 2
    $region68: #{crf_forward.1} parent=5 // pred_fallthru
      _
  $region6: #{crf_forward.1} parent=0 // loop_footer
    %s16 = sadd.s32 1, %s12
  $region7: #{crf_forward.1} parent=0 // loop_footer_branch
    %11 = sbr.rel target = $region3
  $region8: #{crf_forward.1} parent=0 // loop_exit
    _

</llo_original>
